<compile_context>
chip_gen: v5e
topology: v5e:2x2
jax: 0.10.0
libtpu: 0.0.40
codegen_flags: <defaults>
</compile_context>

<pallas_src>
import functools

import jax
import jax.numpy as jnp
from jax.experimental import pallas as pl
from jax.experimental.pallas import tpu as pltpu


def _round_up(x, m):
    return ((x + m - 1) // m) * m


def _cdiv(a, b):
    return -(-a // b)


def _sublane(dtype):
    # sublane tile height per dtype: f32 -> 8, bf16 -> 16, int8/fp8 -> 32
    return {4: 8, 2: 16, 1: 32}.get(jnp.dtype(dtype).itemsize, 8)


def _pick_bb(batch, t_pad, h, k, itemsize, sub):
    """Batch rows per grid step, sized from the real per-step VMEM footprint."""
    budget = 8 * 1024 * 1024  # safe against v5e's 16 MiB default scoped VMEM
    per_row = (t_pad * h * (2 * itemsize + 4)   # double-buffered x tile + f32 x*w product
               + t_pad * k * 4                  # hidden activations (f32)
               + 2 * h * 4)                     # double-buffered output tile (f32)
    bb = budget // max(per_row, 1)
    bb = min(bb, 128)                           # keep temporaries in vregs/VMEM, grid >= 2 sooner
    # v7x megacore: two TensorCores share the "parallel" grid -> want >= 2 grid steps.
    bb = min(bb, max(_round_up(_cdiv(batch, 2), sub), sub))
    bb = min(bb, _round_up(batch, sub))
    return max(sub, (bb // sub) * sub)


def _vmem_bytes(bb, t_pad, h, k, itemsize):
    x_tile = bb * t_pad * h * itemsize * 2            # double-buffered input block
    out_tile = bb * h * 4 * 2                         # double-buffered output block
    params = (h * k + 2 * k) * 4 * 2                  # resident w1 / b1 / w2
    temps = bb * t_pad * (h + k + 2) * 4              # x*w product, hidden acts, energies
    return x_tile + out_tile + params + temps


def _attn_pool_kernel(x_ref, w1_ref, b1_ref, w2_ref, o_ref, *, t_valid, mxu_dtype):
    BB, T, H = x_ref.shape            # T is the (possibly sublane-padded) frame count
    K = w1_ref.shape[1]
    N = BB * T

    x3 = x_ref[...]                                   # (BB, T, H)
    x2d = x3.reshape(N, H)                            # aligned leading-dim merge (layout no-op)

    # ---- Linear(H, K) + ReLU: one big MXU matmul, f32 accumulation -------------------
    xm = x2d if mxu_dtype is None else x2d.astype(mxu_dtype)
    wm = w1_ref[...] if mxu_dtype is None else w1_ref[...].astype(mxu_dtype)
    h = jnp.dot(xm, wm, preferred_element_type=jnp.float32)
    h = jnp.maximum(h + b1_ref[...], 0.0)             # (N, K), f32

    # ---- Linear(K, 1): VPU multiply + lane reduction (b2 dropped: softmax is
    # shift-invariant, so the scalar bias is a mathematical no-op) ----------------------
    h3 = h.reshape(BB, T, K)                          # aligned leading-dim split
    e = jnp.sum(h3 * w2_ref[...], axis=-1, keepdims=True)   # (BB, T, 1), f32

    # ---- compact per-sample softmax over the frame (sublane) axis, O(BB*T) ------------
    if t_valid != T:
        frame = jax.lax.broadcasted_iota(jnp.int32, (BB, T, 1), 1)
        valid = frame < t_valid
        e = jnp.where(valid, e, -1e30)
    m = jnp.max(e, axis=1, keepdims=True)             # (BB, 1, 1)
    p = jnp.exp(e - m)                                # (BB, T, 1)
    if t_valid != T:
        p = jnp.where(valid, p, 0.0)
    l = jnp.sum(p, axis=1, keepdims=True)             # (BB, 1, 1)
    w = p / l                                         # exact divide: weights sum to 1

    # ---- weighted pooling over frames: VPU multiply + sublane reduce (no MXU) ---------
    out = jnp.sum(x3 * w, axis=1)                     # (BB, H), f32 (w is f32)
    o_ref[...] = out.astype(o_ref.dtype)


def video_attention_pooling(x, w1, b1, w2, b2=None, *, mxu_dtype=None):
    """Pallas forward of VideoAttentionPooling.

    x: (B, T, H); w1: (H, 64); b1: (64,); w2: (64, 1); b2: (1,) (accepted but unused:
    softmax over frames is invariant to a per-row constant shift).
    mxu_dtype: optional dtype (e.g. jnp.bfloat16) used only for the in-kernel MXU matmul.
    Returns (B, H) in x's dtype.
    """
    del b2
    B, T, H = x.shape
    K = w1.shape[1]
    out_dtype = x.dtype
    itemsize = jnp.dtype(x.dtype).itemsize

    sub = _sublane(x.dtype)
    T_pad = _round_up(T, sub)                 # pad materialized only for unaligned T
    BB = _pick_bb(B, T_pad, H, K, itemsize, sub)
    Bp = _round_up(B, BB)

    if (Bp, T_pad) != (B, T):
        x = jnp.pad(x, ((0, Bp - B), (0, T_pad - T), (0, 0)))

    b1_row = b1.astype(jnp.float32).reshape(1, K)   # tiny; negligible wrapper cost
    w2_row = w2.astype(jnp.float32).reshape(1, K)   # used as a VPU row, not an MXU operand

    kernel = functools.partial(_attn_pool_kernel, t_valid=T, mxu_dtype=mxu_dtype)

    est = _vmem_bytes(BB, T_pad, H, K, itemsize)
    vmem_limit = int(min(32 * 1024 * 1024, max(2 * est, 16 * 1024 * 1024)))

    out = pl.pallas_call(
        kernel,
        out_shape=jax.ShapeDtypeStruct((Bp, H), out_dtype),
        grid_spec=pltpu.PrefetchScalarGridSpec(
            num_scalar_prefetch=0,
            grid=(Bp // BB,),
            in_specs=[
                pl.BlockSpec((BB, T_pad, H), lambda i: (i, 0, 0)),   # x block (full H extent)
                pl.BlockSpec((H, K), lambda i: (0, 0)),              # W1 (resident)
                pl.BlockSpec((1, K), lambda i: (0, 0)),              # b1 row
                pl.BlockSpec((1, K), lambda i: (0, 0)),              # w2 row
            ],
            out_specs=pl.BlockSpec((BB, H), lambda i: (i, 0)),
        ),
        compiler_params=pltpu.CompilerParams(
            dimension_semantics=("parallel",),    # batch blocks shard across TCs on v7x
            vmem_limit_bytes=vmem_limit,
        ),
    )(x, w1, b1_row, w2_row)

    return out[:B] if Bp != B else out


def _reference(x, w1, b1, w2, b2):
    # Pure-JAX reference mirroring the PyTorch forward.
    h = jnp.maximum(jnp.einsum("bth,hk->btk", x, w1) + b1, 0.0)
    e = (jnp.einsum("btk,ko->bto", h, w2) + b2).squeeze(-1)       # (B, T)
    w = jax.nn.softmax(e, axis=1)                                  # (B, T)
    return jnp.sum(x * w[..., None], axis=1)                       # (B, H)


def _make_params(key, H):
    kw1, kb1, kw2, kb2 = jax.random.split(key, 4)
    lim1 = 1.0 / (H ** 0.5)
    w1 = jax.random.uniform(kw1, (H, 64), jnp.float32, -lim1, lim1)
    b1 = jax.random.uniform(kb1, (64,), jnp.float32, -lim1, lim1)
    lim2 = 1.0 / (64 ** 0.5)
    w2 = jax.random.uniform(kw2, (64, 1), jnp.float32, -lim2, lim2)
    b2 = jax.random.uniform(kb2, (1,), jnp.float32, -lim2, lim2)
    return w1, b1, w2, b2


if __name__ == "__main__":
    key = jax.random.PRNGKey(0)
    k0, k1, k2, k3 = jax.random.split(key, 4)

    # primary shape: batch=2, frames=8, hidden=32 (f32)
    B, T, H = 2, 8, 32
    x = jax.random.normal(k0, (B, T, H), dtype=jnp.float32)
    w1, b1, w2, b2 = _make_params(k1, H)

    out = jax.block_until_ready(video_attention_pooling(x, w1, b1, w2, b2))
    ref = _reference(x, w1, b1, w2, b2)
    assert out.shape == (B, H)
    assert jnp.allclose(out, ref, atol=1e-3, rtol=1e-3), "f32 mismatch vs reference"

    # unaligned shape: exercises batch / frame padding, frame mask, full-extent H blocks
    B2, T2, H2 = 5, 7, 40
    x2 = jax.random.normal(k2, (B2, T2, H2), dtype=jnp.float32)
    w1b, b1b, w2b, b2b = _make_params(k3, H2)
    out2 = jax.block_until_ready(video_attention_pooling(x2, w1b, b1b, w2b, b2b))
    ref2 = _reference(x2, w1b, b1b, w2b, b2b)
    assert out2.shape == (B2, H2)
    assert jnp.allclose(out2, ref2, atol=1e-3, rtol=1e-3), "padded-shape mismatch vs reference"

    # bf16 MXU path: cast happens inside the kernel (no wrapper-side HBM round trip)
    out_bf = jax.block_until_ready(
        video_attention_pooling(x, w1, b1, w2, b2, mxu_dtype=jnp.bfloat16))
    assert jnp.allclose(out_bf, ref, atol=5e-2, rtol=5e-2), "bf16-MXU mismatch vs reference"

    print("KERNEL_OK")
</pallas_src>

<mosaic_0001>
module attributes {stable_mosaic.version = 11 : i64} {
  func.func @_attn_pool_kernel(%arg0: i32, %arg1: memref<8x8x32xf32, #tpu.memory_space<vmem>>, %arg2: memref<32x64xf32, #tpu.memory_space<vmem>>, %arg3: memref<1x64xf32, #tpu.memory_space<vmem>>, %arg4: memref<1x64xf32, #tpu.memory_space<vmem>>, %arg5: memref<8x32xf32, #tpu.memory_space<vmem>>) attributes {dimension_semantics = [#tpu.dimension_semantics<parallel>], iteration_bounds = array<i64: 1>, scalar_prefetch = 0 : i64, scratch_operands = 0 : i64, tpu.core_type = #tpu.core_type<tc>, window_params = [{transform_indices = @transform_0, window_bounds = array<i64: 8, 8, 32>}, {pipeline_mode = #tpu.pipeline_mode<synchronous>, transform_indices = @transform_1, window_bounds = array<i64: 32, 64>}, {pipeline_mode = #tpu.pipeline_mode<synchronous>, transform_indices = @transform_2, window_bounds = array<i64: 1, 64>}, {pipeline_mode = #tpu.pipeline_mode<synchronous>, transform_indices = @transform_3, window_bounds = array<i64: 1, 64>}, {transform_indices = @transform_4, window_bounds = array<i64: 8, 32>}]} {
    %c0 = arith.constant 0 : index
    %c0_0 = arith.constant 0 : index
    %c0_1 = arith.constant 0 : index
    %0 = vector.load %arg1[%c0, %c0_0, %c0_1] : memref<8x8x32xf32, #tpu.memory_space<vmem>>, vector<8x8x32xf32>
    %1 = vector.shape_cast %0 : vector<8x8x32xf32> to vector<64x32xf32>
    %c0_2 = arith.constant 0 : index
    %c0_3 = arith.constant 0 : index
    %2 = vector.load %arg2[%c0_2, %c0_3] : memref<32x64xf32, #tpu.memory_space<vmem>>, vector<32x64xf32>
    %cst = arith.constant dense<0.000000e+00> : vector<64x64xf32>
    %3 = tpu.matmul %1, %2, %cst {dimension_numbers = #tpu.dot_dimension_numbers<[1], [0], [0], [1], [0, 0, 1, 1], [], []>} : vector<64x32xf32>, vector<32x64xf32>, vector<64x64xf32> -> vector<64x64xf32>
    %c0_4 = arith.constant 0 : index
    %c0_5 = arith.constant 0 : index
    %4 = vector.load %arg3[%c0_4, %c0_5] : memref<1x64xf32, #tpu.memory_space<vmem>>, vector<1x64xf32>
    %5 = vector.broadcast %4 : vector<1x64xf32> to vector<64x64xf32>
    %6 = arith.addf %3, %5 : vector<64x64xf32>
    %cst_6 = arith.constant 0.000000e+00 : f32
    %7 = vector.broadcast %cst_6 : f32 to vector<64x64xf32>
    %8 = arith.maximumf %6, %7 : vector<64x64xf32>
    %9 = vector.shape_cast %8 : vector<64x64xf32> to vector<8x8x64xf32>
    %c0_7 = arith.constant 0 : index
    %c0_8 = arith.constant 0 : index
    %10 = vector.load %arg4[%c0_7, %c0_8] : memref<1x64xf32, #tpu.memory_space<vmem>>, vector<1x64xf32>
    %11 = vector.shape_cast %10 : vector<1x64xf32> to vector<1x1x64xf32>
    %12 = vector.broadcast %11 : vector<1x1x64xf32> to vector<8x8x64xf32>
    %13 = arith.mulf %9, %12 : vector<8x8x64xf32>
    %cst_9 = arith.constant dense<0.000000e+00> : vector<8x8xf32>
    %14 = vector.multi_reduction <add>, %13, %cst_9 [2] : vector<8x8x64xf32> to vector<8x8xf32>
    %15 = vector.shape_cast %14 : vector<8x8xf32> to vector<8x8x1xf32>
    %cst_10 = arith.constant dense<0xFF800000> : vector<8x1xf32>
    %16 = vector.multi_reduction <maximumf>, %15, %cst_10 [1] : vector<8x8x1xf32> to vector<8x1xf32>
    %17 = vector.shape_cast %16 : vector<8x1xf32> to vector<8x1x1xf32>
    %18 = vector.broadcast %17 : vector<8x1x1xf32> to vector<8x8x1xf32>
    %19 = arith.subf %15, %18 : vector<8x8x1xf32>
    %20 = math.exp %19 : vector<8x8x1xf32>
    %cst_11 = arith.constant dense<0.000000e+00> : vector<8x1xf32>
    %21 = vector.multi_reduction <add>, %20, %cst_11 [1] : vector<8x8x1xf32> to vector<8x1xf32>
    %22 = vector.shape_cast %21 : vector<8x1xf32> to vector<8x1x1xf32>
    %23 = vector.broadcast %22 : vector<8x1x1xf32> to vector<8x8x1xf32>
    %24 = arith.divf %20, %23 : vector<8x8x1xf32>
    %25 = vector.broadcast %24 : vector<8x8x1xf32> to vector<8x8x32xf32>
    %26 = arith.mulf %0, %25 : vector<8x8x32xf32>
    %cst_12 = arith.constant dense<0.000000e+00> : vector<8x32xf32>
    %27 = vector.multi_reduction <add>, %26, %cst_12 [1] : vector<8x8x32xf32> to vector<8x32xf32>
    %c0_13 = arith.constant 0 : index
    %c0_14 = arith.constant 0 : index
    %28 = vector.load %arg5[%c0_13, %c0_14] : memref<8x32xf32, #tpu.memory_space<vmem>>, vector<8x32xf32>
    tpu.vector_store %arg5[%c0_13, %c0_14], %27 {strides = array<i32>} : memref<8x32xf32, #tpu.memory_space<vmem>>, vector<8x32xf32>,
    return
  }
  func.func @transform_0(%arg0: i32) -> (i32, i32, i32) {
    %c0_i32 = arith.constant 0 : i32
    %c0_i32_0 = arith.constant 0 : i32
    %c0_i32_1 = arith.constant 0 : i32
    return %arg0, %c0_i32, %c0_i32_0 : i32, i32, i32
  }
  func.func @transform_1(%arg0: i32) -> (i32, i32) {
    %c0_i32 = arith.constant 0 : i32
    %c0_i32_0 = arith.constant 0 : i32
    %c0_i32_1 = arith.constant 0 : i32
    return %c0_i32, %c0_i32_0 : i32, i32
  }
  func.func @transform_2(%arg0: i32) -> (i32, i32) {
    %c0_i32 = arith.constant 0 : i32
    %c0_i32_0 = arith.constant 0 : i32
    %c0_i32_1 = arith.constant 0 : i32
    return %c0_i32, %c0_i32_0 : i32, i32
  }
  func.func @transform_3(%arg0: i32) -> (i32, i32) {
    %c0_i32 = arith.constant 0 : i32
    %c0_i32_0 = arith.constant 0 : i32
    %c0_i32_1 = arith.constant 0 : i32
    return %c0_i32, %c0_i32_0 : i32, i32
  }
  func.func @transform_4(%arg0: i32) -> (i32, i32) {
    %c0_i32 = arith.constant 0 : i32
    %c0_i32_0 = arith.constant 0 : i32
    return %arg0, %c0_i32 : i32, i32
  }
}

</mosaic_0001>

<llo_original>
// kernel: tpu_custom_call.1
$region0: #{tpu_custom_call.1}
  #allocation0 [shape = 'u32[]', space=smem, size = 0x4, offset = 0x4, fixed_abs, tag = 'smem constant byte address 0x4 - core index']
  #allocation1 [shape = 'u32[72,128]{1,0:T(1,128)}', space=vmem, size = 0x9000, scoped, tag = 'internal scratch']
  %s0 = inlined_call_operand.hbm [shape: f32[8,8,32], index: 0, kind: input, shape index: {}]
  %s1 = inlined_call_operand.hbm [shape: f32[32,64], index: 1, kind: input, shape index: {}]
  %s2 = inlined_call_operand.vmem [shape: f32[1,64], index: 2, kind: input, shape index: {}]
  %s3 = inlined_call_operand.vmem [shape: f32[1,64], index: 3, kind: input, shape index: {}]
  %s4 = inlined_call_operand.hbm [shape: f32[8,32], index: 4, kind: output, shape index: {}]
  %s5 = sld [smem:[#allocation0]]
  $region34: #{tpu_custom_call.1} parent=0
    _
  %s7 = ssub.s32 1, %s5
  %s8 = scalar_select 0, %s7, %s5
  $region1: #{tpu_custom_call.1} parent=0
    #allocation2 [shape = 'u8[32768]{0}', space=vmem, size = 0x8000, scoped, tag = 'input window, operand 0, single buffered']
    #allocation3 [shape = 's32[1]{0}', space=sflag, size = 0x4, scoped, tag = 'scoped memory for tpu_custom_call.1']
    #allocation4 [shape = 's32[1]{0}', space=sflag, size = 0x4, scoped, tag = 'scoped memory for tpu_custom_call.1']
    #allocation5 [shape = 'u8[16384]{0}', space=vmem, size = 0x4000, scoped, tag = 'input window, operand 1, single buffered']
    #allocation6 [shape = 's32[1]{0}', space=sflag, size = 0x4, scoped, tag = 'scoped memory for tpu_custom_call.1']
    #allocation7 [shape = 'u8[4096]{0}', space=vmem, size = 0x1000, scoped, tag = 'output window, operand 0, single buffered']
    %9 = vsyncpa [#allocation3], 0
    %10 = vsyncpa [#allocation6], 0
    %11 = vsyncpa [#allocation4], 0
    // Predicated region
    $region2: #{tpu_custom_call.1} parent=1 // pred_check
      _
    $region3: #{tpu_custom_call.1} parent=1 // pred_check_branch
      %13 = sbr.rel (0) target = $region5
    $region4: #{tpu_custom_call.1} parent=1 // pred_region
      %15 = vsyncadd [#allocation3], 0
      %s16 = sshll.u32 %s0, 4
      %s17 = int_to_ptr.hbm [resolvable:$true] %s16
      %s18 = sshll.u32 [#allocation2], 4
      %s19 = int_to_ptr.vmem [resolvable:$true] %s18
      %24 = dma.hbm_to_vmem [thread:$0]  %s17, 1024, %s19, [#allocation3], 128, 128, 8
    $region5: #{tpu_custom_call.1} parent=1 // pred_fallthru
      _
    // Predicated region
    $region6: #{tpu_custom_call.1} parent=1 // pred_check
      _
    $region7: #{tpu_custom_call.1} parent=1 // pred_check_branch
      %26 = sbr.rel (0) target = $region9
    $region8: #{tpu_custom_call.1} parent=1 // pred_region
      %28 = vsyncadd [#allocation6], 0
      %s29 = sshll.u32 %s1, 4
      %s30 = int_to_ptr.hbm [resolvable:$true] %s29
      %s31 = sshll.u32 [#allocation5], 4
      %s32 = int_to_ptr.vmem [resolvable:$true] %s31
      %37 = dma.hbm_to_vmem [thread:$0]  %s30, 512, %s32, [#allocation6], 128, 128, 8
    $region9: #{tpu_custom_call.1} parent=1 // pred_fallthru
      _
    // Predicated region
    $region10: #{tpu_custom_call.1} parent=1 // pred_check
      _
    $region11: #{tpu_custom_call.1} parent=1 // pred_check_branch
      %39 = sbr.rel (0) target = $region13
    $region12: #{tpu_custom_call.1} parent=1 // pred_region
      _
    $region13: #{tpu_custom_call.1} parent=1 // pred_fallthru
      _
    // Predicated region
    $region14: #{tpu_custom_call.1} parent=1 // pred_check
      _
    $region15: #{tpu_custom_call.1} parent=1 // pred_check_branch
      %41 = sbr.rel (0) target = $region17
    $region16: #{tpu_custom_call.1} parent=1 // pred_region
      _
    $region17: #{tpu_custom_call.1} parent=1 // pred_fallthru
      _
    // Predicated region
    $region18: #{tpu_custom_call.1} parent=1 // pred_check
      _
    $region19: #{tpu_custom_call.1} parent=1 // pred_check_branch
      %43 = sbr.rel (0) target = $region21
    $region20: #{tpu_custom_call.1} parent=1 // pred_region
      %45 = dma.done [#allocation3], 1024
    $region21: #{tpu_custom_call.1} parent=1 // pred_fallthru
      _
    // Predicated region
    $region22: #{tpu_custom_call.1} parent=1 // pred_check
      _
    $region23: #{tpu_custom_call.1} parent=1 // pred_check_branch
      %47 = sbr.rel (0) target = $region25
    $region24: #{tpu_custom_call.1} parent=1 // pred_region
      %49 = dma.done [#allocation6], 512
    $region25: #{tpu_custom_call.1} parent=1 // pred_fallthru
      _
    %v50 = vld [vmem:[#allocation2] sm:$0xff]
    %v51 = vld [vmem:[#allocation2 + $0x8] sm:$0xff]
    %v52 = vld [vmem:[#allocation2 + $0x10] sm:$0xff]
    %v53 = vld [vmem:[#allocation2 + $0x18] sm:$0xff]
    %v54 = vld [vmem:[#allocation2 + $0x20] sm:$0xff]
    %v55 = vld [vmem:[#allocation2 + $0x28] sm:$0xff]
    %v56 = vld [vmem:[#allocation2 + $0x30] sm:$0xff]
    %v57 = vld [vmem:[#allocation2 + $0x38] sm:$0xff]
    %v58 = vld [vmem:[#allocation5] sm:$0xff]
    %v59 = vld [vmem:[#allocation5 + $0x8] sm:$0xff]
    %v60 = vld [vmem:[#allocation5 + $0x10] sm:$0xff]
    %v61 = vld [vmem:[#allocation5 + $0x18] sm:$0xff]
    %v62 = vld [vmem:[%s2] sm:$0x1]
    %v64 = vperm.slane %v62, 0
    %vm66 = vcmask 261120
    %v68 = vsel %vm66, %v50, 0
    %v71 = vsel %vm66, %v51, 0
    %v74 = vsel %vm66, %v52, 0
    %v77 = vsel %vm66, %v53, 0
    %v80 = vsel %vm66, %v54, 0
    %v83 = vsel %vm66, %v55, 0
    %v86 = vsel %vm66, %v56, 0
    %v89 = vsel %vm66, %v57, 0
    %91 = vmatpush.msra.mxu0 0.0
    %92 = vmatpush.msra.mxu0 0.0
    %93 = vmatpush.msra.mxu0 0.0
    %94 = vmatpush.msra.mxu0 0.0
    %95 = vmatpush.msra.mxu0 0.0
    %96 = vmatpush.msra.mxu0 0.0
    %97 = vmatpush.msra.mxu0 0.0
    %98 = vmatpush.msra.mxu0 0.0
    %99 = vmatpush.msra.mxu0 0.0
    %100 = vmatpush.msra.mxu0 0.0
    %101 = vmatpush.msra.mxu0 0.0
    %102 = vmatpush.msra.mxu0 0.0
    %103 = vmatpush.msra.mxu0 %v61
    %104 = vmatpush.msra.mxu0 %v60
    %105 = vmatpush.msra.mxu0 %v59
    %106 = vmatpush.msra.mxu0 %v58
    %107 = vmatmul.f32.gmra.mxu0 %v68
    %v108 = vpop.f32.mrf.mxu0
    %v109 = vadd.f32 %v64, %v108
    %110 = vmatmul.f32.gmra.mxu0 %v71
    %v111 = vpop.f32.mrf.mxu0
    %v112 = vadd.f32 %v64, %v111
    %113 = vmatmul.f32.gmra.mxu0 %v74
    %v114 = vpop.f32.mrf.mxu0
    %v115 = vadd.f32 %v64, %v114
    %116 = vmatmul.f32.gmra.mxu0 %v77
    %v117 = vpop.f32.mrf.mxu0
    %v118 = vadd.f32 %v64, %v117
    %119 = vmatmul.f32.gmra.mxu0 %v80
    %v120 = vpop.f32.mrf.mxu0
    %v121 = vadd.f32 %v64, %v120
    %122 = vmatmul.f32.gmra.mxu0 %v83
    %v123 = vpop.f32.mrf.mxu0
    %v124 = vadd.f32 %v64, %v123
    %125 = vmatmul.f32.gmra.mxu0 %v86
    %v126 = vpop.f32.mrf.mxu0
    %v127 = vadd.f32 %v64, %v126
    %128 = vmatmul.f32.gmra.mxu0 %v89
    %v129 = vpop.f32.mrf.mxu0
    %v130 = vadd.f32 %v64, %v129
    %131 = vdwg.mxu0
    %v132 = vmax.f32 %v109, 0.0
    %v133 = vmax.f32 %v112, 0.0
    %v134 = vmax.f32 %v115, 0.0
    %v135 = vmax.f32 %v118, 0.0
    %v136 = vmax.f32 %v121, 0.0
    %v137 = vmax.f32 %v124, 0.0
    %v138 = vmax.f32 %v127, 0.0
    %v139 = vmax.f32 %v130, 0.0
    %v140 = vld [vmem:[%s3] sm:$0x1]
    %v142 = vperm.slane %v140, 0
    %v144 = vmul.f32 %v132, %v142
    %v145 = vmul.f32 %v133, %v142
    %v146 = vmul.f32 %v134, %v142
    %v147 = vmul.f32 %v135, %v142
    %v148 = vmul.f32 %v136, %v142
    %v149 = vmul.f32 %v137, %v142
    %v150 = vmul.f32 %v138, %v142
    %v151 = vmul.f32 %v139, %v142
    %vm152 = vcmask 523264
    %v153 = vsel %vm152, %v144, 0.0
    %154 = vadd.xlane.f32.xlu0 %v153
    %v155 = vpop.xlane.xlu0 %154
    %v156 = vsel %vm152, %v145, 0.0
    %157 = vadd.xlane.f32.xlu0 %v156
    %v158 = vpop.xlane.xlu0 %157
    %v159 = vsel %vm152, %v146, 0.0
    %160 = vadd.xlane.f32.xlu0 %v159
    %v161 = vpop.xlane.xlu0 %160
    %v162 = vsel %vm152, %v147, 0.0
    %163 = vadd.xlane.f32.xlu0 %v162
    %v164 = vpop.xlane.xlu0 %163
    %v165 = vsel %vm152, %v148, 0.0
    %166 = vadd.xlane.f32.xlu0 %v165
    %v167 = vpop.xlane.xlu0 %166
    %v168 = vsel %vm152, %v149, 0.0
    %169 = vadd.xlane.f32.xlu0 %v168
    %v170 = vpop.xlane.xlu0 %169
    %v171 = vsel %vm152, %v150, 0.0
    %172 = vadd.xlane.f32.xlu0 %v171
    %v173 = vpop.xlane.xlu0 %172
    %v174 = vsel %vm152, %v151, 0.0
    %175 = vadd.xlane.f32.xlu0 %v174
    %v176 = vpop.xlane.xlu0 %175
    %v177 = vrot.slane %v155, 4
    %v178 = vmax.f32 %v155, %v177
    %v179 = vrot.slane %v178, 2
    %v180 = vmax.f32 %v178, %v179
    %v181 = vrot.slane %v180, 1
    %v182 = vmax.f32 %v180, %v181
    %v183 = vrot.slane %v158, 4
    %v184 = vmax.f32 %v158, %v183
    %v185 = vrot.slane %v184, 2
    %v186 = vmax.f32 %v184, %v185
    %v187 = vrot.slane %v186, 1
    %v188 = vmax.f32 %v186, %v187
    %v189 = vrot.slane %v161, 4
    %v190 = vmax.f32 %v161, %v189
    %v191 = vrot.slane %v190, 2
    %v192 = vmax.f32 %v190, %v191
    %v193 = vrot.slane %v192, 1
    %v194 = vmax.f32 %v192, %v193
    %v195 = vrot.slane %v164, 4
    %v196 = vmax.f32 %v164, %v195
    %v197 = vrot.slane %v196, 2
    %v198 = vmax.f32 %v196, %v197
    %v199 = vrot.slane %v198, 1
    %v200 = vmax.f32 %v198, %v199
    %v201 = vrot.slane %v167, 4
    %v202 = vmax.f32 %v167, %v201
    %v203 = vrot.slane %v202, 2
    %v204 = vmax.f32 %v202, %v203
    %v205 = vrot.slane %v204, 1
    %v206 = vmax.f32 %v204, %v205
    %v207 = vrot.slane %v170, 4
    %v208 = vmax.f32 %v170, %v207
    %v209 = vrot.slane %v208, 2
    %v210 = vmax.f32 %v208, %v209
    %v211 = vrot.slane %v210, 1
    %v212 = vmax.f32 %v210, %v211
    %v213 = vrot.slane %v173, 4
    %v214 = vmax.f32 %v173, %v213
    %v215 = vrot.slane %v214, 2
    %v216 = vmax.f32 %v214, %v215
    %v217 = vrot.slane %v216, 1
    %v218 = vmax.f32 %v216, %v217
    %v219 = vrot.slane %v176, 4
    %v220 = vmax.f32 %v176, %v219
    %v221 = vrot.slane %v220, 2
    %v222 = vmax.f32 %v220, %v221
    %v223 = vrot.slane %v222, 1
    %v224 = vmax.f32 %v222, %v223
    %v225 = vsub.f32 %v155, %v182
    %v226 = vsub.f32 %v158, %v188
    %v227 = vsub.f32 %v161, %v194
    %v228 = vsub.f32 %v164, %v200
    %v229 = vsub.f32 %v167, %v206
    %v230 = vsub.f32 %v170, %v212
    %v231 = vsub.f32 %v173, %v218
    %v232 = vsub.f32 %v176, %v224
    %v233 = vmul.f32 %v225, 1.442695
    %v234 = vpow.pop %v233
    %v235 = vmul.f32 %v226, 1.442695
    %v236 = vpow.pop %v235
    %v237 = vmul.f32 %v227, 1.442695
    %v238 = vpow.pop %v237
    %v239 = vmul.f32 %v228, 1.442695
    %v240 = vpow.pop %v239
    %v241 = vmul.f32 %v229, 1.442695
    %v242 = vpow.pop %v241
    %v243 = vmul.f32 %v230, 1.442695
    %v244 = vpow.pop %v243
    %v245 = vmul.f32 %v231, 1.442695
    %v246 = vpow.pop %v245
    %v247 = vmul.f32 %v232, 1.442695
    %v248 = vpow.pop %v247
    %v249 = vrot.slane %v234, 4
    %v250 = vadd.f32 %v234, %v249
    %v251 = vrot.slane %v250, 2
    %v252 = vadd.f32 %v250, %v251
    %v253 = vrot.slane %v252, 1
    %v254 = vadd.f32 %v252, %v253
    %v255 = vrot.slane %v236, 4
    %v256 = vadd.f32 %v236, %v255
    %v257 = vrot.slane %v256, 2
    %v258 = vadd.f32 %v256, %v257
    %v259 = vrot.slane %v258, 1
    %v260 = vadd.f32 %v258, %v259
    %v261 = vrot.slane %v238, 4
    %v262 = vadd.f32 %v238, %v261
    %v263 = vrot.slane %v262, 2
    %v264 = vadd.f32 %v262, %v263
    %v265 = vrot.slane %v264, 1
    %v266 = vadd.f32 %v264, %v265
    %v267 = vrot.slane %v240, 4
    %v268 = vadd.f32 %v240, %v267
    %v269 = vrot.slane %v268, 2
    %v270 = vadd.f32 %v268, %v269
    %v271 = vrot.slane %v270, 1
    %v272 = vadd.f32 %v270, %v271
    %v273 = vrot.slane %v242, 4
    %v274 = vadd.f32 %v242, %v273
    %v275 = vrot.slane %v274, 2
    %v276 = vadd.f32 %v274, %v275
    %v277 = vrot.slane %v276, 1
    %v278 = vadd.f32 %v276, %v277
    %v279 = vrot.slane %v244, 4
    %v280 = vadd.f32 %v244, %v279
    %v281 = vrot.slane %v280, 2
    %v282 = vadd.f32 %v280, %v281
    %v283 = vrot.slane %v282, 1
    %v284 = vadd.f32 %v282, %v283
    %v285 = vrot.slane %v246, 4
    %v286 = vadd.f32 %v246, %v285
    %v287 = vrot.slane %v286, 2
    %v288 = vadd.f32 %v286, %v287
    %v289 = vrot.slane %v288, 1
    %v290 = vadd.f32 %v288, %v289
    %v291 = vrot.slane %v248, 4
    %v292 = vadd.f32 %v248, %v291
    %v293 = vrot.slane %v292, 2
    %v294 = vadd.f32 %v292, %v293
    %v295 = vrot.slane %v294, 1
    %v296 = vadd.f32 %v294, %v295
    %v297 = vrcp.pop %v254
    %v298 = vmul.f32 %v254, %v297
    %v299 = vsub.f32 1.0, %v298
    %v300 = vmul.f32 %v297, %v299
    %v301 = vadd.f32 %v297, %v300
    %vm302 = vweird.f32 %v254
    %vm303 = vweird.f32 %v297
    %vm304 = vmor %vm302, %vm303
    %v305 = vsel %vm304, %v297, %v301
    %v306 = vand.u32 2147483647, %v254
    %vm307 = vcmp.eq.f32.partialorder %v306, 8.507059e+37
    %v308 = vand.u32 %v254, 2147483648
    %v309 = vor.u32 1.1754944e-38, %v308
    %v310 = vsel %vm307, %v309, %v305
    %v311 = vmul.f32 %v234, %v310
    %v312 = vrcp.pop %v260
    %v313 = vmul.f32 %v260, %v312
    %v314 = vsub.f32 1.0, %v313
    %v315 = vmul.f32 %v312, %v314
    %v316 = vadd.f32 %v312, %v315
    %vm317 = vweird.f32 %v260
    %vm318 = vweird.f32 %v312
    %vm319 = vmor %vm317, %vm318
    %v320 = vsel %vm319, %v312, %v316
    %v321 = vand.u32 2147483647, %v260
    %vm322 = vcmp.eq.f32.partialorder %v321, 8.507059e+37
    %v323 = vand.u32 %v260, 2147483648
    %v324 = vor.u32 1.1754944e-38, %v323
    %v325 = vsel %vm322, %v324, %v320
    %v326 = vmul.f32 %v236, %v325
    %v327 = vrcp.pop %v266
    %v328 = vmul.f32 %v266, %v327
    %v329 = vsub.f32 1.0, %v328
    %v330 = vmul.f32 %v327, %v329
    %v331 = vadd.f32 %v327, %v330
    %vm332 = vweird.f32 %v266
    %vm333 = vweird.f32 %v327
    %vm334 = vmor %vm332, %vm333
    %v335 = vsel %vm334, %v327, %v331
    %v336 = vand.u32 2147483647, %v266
    %vm337 = vcmp.eq.f32.partialorder %v336, 8.507059e+37
    %v338 = vand.u32 %v266, 2147483648
    %v339 = vor.u32 1.1754944e-38, %v338
    %v340 = vsel %vm337, %v339, %v335
    %v341 = vmul.f32 %v238, %v340
    %v342 = vrcp.pop %v272
    %v343 = vmul.f32 %v272, %v342
    %v344 = vsub.f32 1.0, %v343
    %v345 = vmul.f32 %v342, %v344
    %v346 = vadd.f32 %v342, %v345
    %vm347 = vweird.f32 %v272
    %vm348 = vweird.f32 %v342
    %vm349 = vmor %vm347, %vm348
    %v350 = vsel %vm349, %v342, %v346
    %v351 = vand.u32 2147483647, %v272
    %vm352 = vcmp.eq.f32.partialorder %v351, 8.507059e+37
    %v353 = vand.u32 %v272, 2147483648
    %v354 = vor.u32 1.1754944e-38, %v353
    %v355 = vsel %vm352, %v354, %v350
    %v356 = vmul.f32 %v240, %v355
    %v357 = vrcp.pop %v278
    %v358 = vmul.f32 %v278, %v357
    %v359 = vsub.f32 1.0, %v358
    %v360 = vmul.f32 %v357, %v359
    %v361 = vadd.f32 %v357, %v360
    %vm362 = vweird.f32 %v278
    %vm363 = vweird.f32 %v357
    %vm364 = vmor %vm362, %vm363
    %v365 = vsel %vm364, %v357, %v361
    %v366 = vand.u32 2147483647, %v278
    %vm367 = vcmp.eq.f32.partialorder %v366, 8.507059e+37
    %v368 = vand.u32 %v278, 2147483648
    %v369 = vor.u32 1.1754944e-38, %v368
    %v370 = vsel %vm367, %v369, %v365
    %v371 = vmul.f32 %v242, %v370
    %v372 = vrcp.pop %v284
    %v373 = vmul.f32 %v284, %v372
    %v374 = vsub.f32 1.0, %v373
    %v375 = vmul.f32 %v372, %v374
    %v376 = vadd.f32 %v372, %v375
    %vm377 = vweird.f32 %v284
    %vm378 = vweird.f32 %v372
    %vm379 = vmor %vm377, %vm378
    %v380 = vsel %vm379, %v372, %v376
    %v381 = vand.u32 2147483647, %v284
    %vm382 = vcmp.eq.f32.partialorder %v381, 8.507059e+37
    %v383 = vand.u32 %v284, 2147483648
    %v384 = vor.u32 1.1754944e-38, %v383
    %v385 = vsel %vm382, %v384, %v380
    %v386 = vmul.f32 %v244, %v385
    %v387 = vrcp.pop %v290
    %v388 = vmul.f32 %v290, %v387
    %v389 = vsub.f32 1.0, %v388
    %v390 = vmul.f32 %v387, %v389
    %v391 = vadd.f32 %v387, %v390
    %vm392 = vweird.f32 %v290
    %vm393 = vweird.f32 %v387
    %vm394 = vmor %vm392, %vm393
    %v395 = vsel %vm394, %v387, %v391
    %v396 = vand.u32 2147483647, %v290
    %vm397 = vcmp.eq.f32.partialorder %v396, 8.507059e+37
    %v398 = vand.u32 %v290, 2147483648
    %v399 = vor.u32 1.1754944e-38, %v398
    %v400 = vsel %vm397, %v399, %v395
    %v401 = vmul.f32 %v246, %v400
    %v402 = vrcp.pop %v296
    %v403 = vmul.f32 %v296, %v402
    %v404 = vsub.f32 1.0, %v403
    %v405 = vmul.f32 %v402, %v404
    %v406 = vadd.f32 %v402, %v405
    %vm407 = vweird.f32 %v296
    %vm408 = vweird.f32 %v402
    %vm409 = vmor %vm407, %vm408
    %v410 = vsel %vm409, %v402, %v406
    %v411 = vand.u32 2147483647, %v296
    %vm412 = vcmp.eq.f32.partialorder %v411, 8.507059e+37
    %v413 = vand.u32 %v296, 2147483648
    %v414 = vor.u32 1.1754944e-38, %v413
    %v415 = vsel %vm412, %v414, %v410
    %v416 = vmul.f32 %v248, %v415
    %v417 = vmul.f32 %v50, %v311
    %v418 = vmul.f32 %v51, %v326
    %v419 = vmul.f32 %v52, %v341
    %v420 = vmul.f32 %v53, %v356
    %v421 = vmul.f32 %v54, %v371
    %v422 = vmul.f32 %v55, %v386
    %v423 = vmul.f32 %v56, %v401
    %v424 = vmul.f32 %v57, %v416
    %v425 = vsel %vm66, %v417, 0.0
    %v426 = vrot.slane %v425, 4
    %v427 = vadd.f32 %v425, %v426
    %v428 = vrot.slane %v427, 2
    %v429 = vadd.f32 %v427, %v428
    %v430 = vrot.slane %v429, 1
    %v431 = vadd.f32 %v429, %v430
    %v432 = vsel %vm66, %v418, 0.0
    %v433 = vrot.slane %v432, 4
    %v434 = vadd.f32 %v432, %v433
    %v435 = vrot.slane %v434, 2
    %v436 = vadd.f32 %v434, %v435
    %v437 = vrot.slane %v436, 1
    %v438 = vadd.f32 %v436, %v437
    %v439 = vsel %vm66, %v419, 0.0
    %v440 = vrot.slane %v439, 4
    %v441 = vadd.f32 %v439, %v440
    %v442 = vrot.slane %v441, 2
    %v443 = vadd.f32 %v441, %v442
    %v444 = vrot.slane %v443, 1
    %v445 = vadd.f32 %v443, %v444
    %v446 = vsel %vm66, %v420, 0.0
    %v447 = vrot.slane %v446, 4
    %v448 = vadd.f32 %v446, %v447
    %v449 = vrot.slane %v448, 2
    %v450 = vadd.f32 %v448, %v449
    %v451 = vrot.slane %v450, 1
    %v452 = vadd.f32 %v450, %v451
    %v453 = vsel %vm66, %v421, 0.0
    %v454 = vrot.slane %v453, 4
    %v455 = vadd.f32 %v453, %v454
    %v456 = vrot.slane %v455, 2
    %v457 = vadd.f32 %v455, %v456
    %v458 = vrot.slane %v457, 1
    %v459 = vadd.f32 %v457, %v458
    %v460 = vsel %vm66, %v422, 0.0
    %v461 = vrot.slane %v460, 4
    %v462 = vadd.f32 %v460, %v461
    %v463 = vrot.slane %v462, 2
    %v464 = vadd.f32 %v462, %v463
    %v465 = vrot.slane %v464, 1
    %v466 = vadd.f32 %v464, %v465
    %v467 = vsel %vm66, %v423, 0.0
    %v468 = vrot.slane %v467, 4
    %v469 = vadd.f32 %v467, %v468
    %v470 = vrot.slane %v469, 2
    %v471 = vadd.f32 %v469, %v470
    %v472 = vrot.slane %v471, 1
    %v473 = vadd.f32 %v471, %v472
    %v474 = vsel %vm66, %v424, 0.0
    %v475 = vrot.slane %v474, 4
    %v476 = vadd.f32 %v474, %v475
    %v477 = vrot.slane %v476, 2
    %v478 = vadd.f32 %v476, %v477
    %v479 = vrot.slane %v478, 1
    %v480 = vadd.f32 %v478, %v479
    %vm489 = vcmask 1041409
    %v490 = vsel %vm489, %v438, %v431
    %vm491 = vcmask 1042434
    %v492 = vsel %vm491, %v445, %v490
    %vm493 = vcmask 1043459
    %v494 = vsel %vm493, %v452, %v492
    %vm495 = vcmask 1044484
    %v496 = vsel %vm495, %v459, %v494
    %vm497 = vcmask 1045509
    %v498 = vsel %vm497, %v466, %v496
    %vm499 = vcmask 1046534
    %v500 = vsel %vm499, %v473, %v498
    %vm501 = vcmask 1047559
    %v502 = vsel %vm501, %v480, %v500
    %504 = vst.msk [vmem:[#allocation7] sm:$0xff] %vm66, %v502
    // Predicated region
    $region26: #{tpu_custom_call.1} parent=1 // pred_check
      _
    $region27: #{tpu_custom_call.1} parent=1 // pred_check_branch
      %506 = sbr.rel (0) target = $region29
    $region28: #{tpu_custom_call.1} parent=1 // pred_region
      %508 = vsyncadd [#allocation4], 0
      %s510 = sshll.u32 [#allocation7], 4
      %s511 = int_to_ptr.vmem [resolvable:$true] %s510
      %s512 = sshll.u32 %s4, 4
      %s513 = int_to_ptr.hbm [resolvable:$true] %s512
      %515 = dma.vmem_to_hbm [thread:$0]  %s511, 128, %s513, [#allocation4]
    $region29: #{tpu_custom_call.1} parent=1 // pred_fallthru
      _
    // Predicated region
    $region30: #{tpu_custom_call.1} parent=1 // pred_check
      _
    $region31: #{tpu_custom_call.1} parent=1 // pred_check_branch
      %517 = sbr.rel (0) target = $region33
    $region32: #{tpu_custom_call.1} parent=1 // pred_region
      %519 = dma.done [#allocation4], 128
    $region33: #{tpu_custom_call.1} parent=1 // pred_fallthru
      _
    %520 = vsyncpa [#allocation3], 1
    %521 = vsyncpa [#allocation6], 1
    %522 = vsyncpa [#allocation4], 1

</llo_original>
